<compile_context>
chip_gen: v6e
topology: v6e:2x2x1
jax: 0.10.0
libtpu: 0.0.40
codegen_flags: <defaults>
</compile_context>

<pallas_src>
import math

import jax
import jax.numpy as jnp
from jax.experimental import pallas as pl
from jax.experimental.pallas import tpu as pltpu


# ----------------------------- per-channel math ------------------------------

def _Phi(x):
    return 0.5 * (1.0 + jax.lax.erf(x / jnp.sqrt(jnp.float32(2.0))))


def _phi(x):
    return (1.0 / jnp.sqrt(jnp.float32(2.0 * math.pi))) * jnp.exp(-0.5 * x * x)


def _channel_coeffs(pre_bias, weight, eps=1e-12):
    """Fused per-channel coefficients, shape (C, 5) float32.

    Positive branch:  out = inv_std * x + (b - mean) * inv_std
    Negative branch:  out = w*inv_std * x + (w*b - mean) * inv_std
    Branch condition: x >= -b
    """
    b = pre_bias.astype(jnp.float32)
    w = weight.astype(jnp.float32)
    phi_t = _phi(-b)
    Phi_t = _Phi(-b)
    mean = b + (w - 1.0) * (Phi_t * b - phi_t)
    ex2 = 1.0 + b * b + (w * w - 1.0) * (Phi_t * (1.0 + b * b) - phi_t * b)
    var = jnp.maximum(ex2 - mean * mean, eps)   # clamp: avoid NaN from rounding
    inv_std = 1.0 / jnp.sqrt(var)
    thresh = -b
    a_pos = inv_std
    c_pos = (b - mean) * inv_std
    a_neg = w * inv_std
    c_neg = (w * b - mean) * inv_std
    return jnp.stack([thresh, a_pos, c_pos, a_neg, c_neg], axis=-1)  # (C, 5)


# --------------------------------- kernel ------------------------------------

def _wnprelu_kernel(x_ref, p_ref, o_ref):
    # x_ref: (TR, TL) input tile (rows = N*C slice, lanes = H*W slice)
    # p_ref: (TR, 5)  per-row fused coefficients [thresh, a_pos, c_pos, a_neg, c_neg]
    # o_ref: (TR, TL) output tile
    x = x_ref[...].astype(jnp.float32)
    thresh = p_ref[:, 0:1]                       # (TR, 1) -> lane broadcast
    pos = p_ref[:, 1:2] * x + p_ref[:, 2:3]
    neg = p_ref[:, 3:4] * x + p_ref[:, 4:5]
    o_ref[...] = jnp.where(x >= thresh, pos, neg).astype(o_ref.dtype)


# -------------------------------- wrapper -------------------------------------

def wnprelu_forward(x_nchw, pre_bias, weight, *,
                    target_block_bytes=4 << 20, max_lane_tile=2048):
    """x_nchw: (N, C, H, W); pre_bias, weight: (C,)."""
    N, C, H, W = x_nchw.shape
    dtype = x_nchw.dtype
    rows = N * C
    lanes = H * W

    # Fused per-channel coefficients, tiled to per-row (row r -> channel r % C).
    coeffs = _channel_coeffs(pre_bias, weight)           # (C, 5)
    params = jnp.tile(coeffs, (N, 1))                    # (N*C, 5)

    # Free, transpose-less reshape: NCHW is already (N*C) x (H*W) contiguous.
    x2d = x_nchw.reshape(rows, lanes)

    # Lane tile: full spatial extent if modest, else a 128-aligned tile.
    tl = lanes if lanes <= max_lane_tile else max_lane_tile

    # Row tile: multiple of 8 sized so one block is ~target_block_bytes of I/O dtype.
    itemsize = jnp.dtype(dtype).itemsize
    tr_target = max(8, target_block_bytes // (itemsize * tl))
    if rows < 8:
        tr = rows                                        # full-dim block (tiny case)
    else:
        tr = min(int(tr_target), rows)
        tr = max(8, (tr // 8) * 8)

    grid = (pl.cdiv(rows, tr), pl.cdiv(lanes, tl))       # masked tails, no giant fallback

    out2d = pl.pallas_call(
        _wnprelu_kernel,
        out_shape=jax.ShapeDtypeStruct((rows, lanes), dtype),
        grid_spec=pltpu.PrefetchScalarGridSpec(
            num_scalar_prefetch=0,
            grid=grid,
            in_specs=[
                pl.BlockSpec((tr, tl), lambda i, j: (i, j)),   # x
                pl.BlockSpec((tr, 5), lambda i, j: (i, 0)),    # fused params
            ],
            out_specs=pl.BlockSpec((tr, tl), lambda i, j: (i, j)),
        ),
        compiler_params=pltpu.CompilerParams(
            dimension_semantics=("parallel", "parallel"),
            vmem_limit_bytes=32 << 20,   # fits double-buffered 4 MiB in/out tiles everywhere
        ),
    )(x2d, params)

    return out2d.reshape(N, C, H, W)


# ------------------------------- reference ------------------------------------

def wnprelu_reference(x_nchw, pre_bias, weight):
    phi_t = _phi(-pre_bias)
    Phi_t = _Phi(-pre_bias)
    mean = pre_bias + (weight - 1.0) * (Phi_t * pre_bias - phi_t)
    ex2 = (1.0 + pre_bias ** 2
           + (weight ** 2 - 1.0) * (Phi_t * (1.0 + pre_bias ** 2) - phi_t * pre_bias))
    std = jnp.sqrt(ex2 - mean ** 2)
    b = pre_bias.reshape(1, -1, 1, 1)
    m = mean.reshape(1, -1, 1, 1)
    s = std.reshape(1, -1, 1, 1)
    w = weight.reshape(1, -1, 1, 1)
    xb = x_nchw + b
    pr = jnp.where(xb >= 0.0, xb, w * xb)
    return (pr - m) / s


if __name__ == "__main__":
    key = jax.random.PRNGKey(0)
    N, C, H, W = 2, 4, 16, 16

    # deterministic parameter init matching nn.Module.__init__:
    #   pre_bias = zeros(C); weight = full(C, 0.25)
    # perturb pre_bias deterministically so the stats path is exercised.
    k_x, k_b = jax.random.split(key)
    x = jax.random.normal(k_x, (N, C, H, W), dtype=jnp.float32)
    pre_bias = 0.1 * jax.random.normal(k_b, (C,), dtype=jnp.float32)
    weight = jnp.full((C,), 0.25, dtype=jnp.float32)

    out = wnprelu_forward(x, pre_bias, weight)
    out = jax.block_until_ready(out)

    ref = wnprelu_reference(x, pre_bias, weight)
    assert out.shape == (N, C, H, W)
    assert out.dtype == x.dtype
    assert jnp.allclose(out, ref, atol=1e-5, rtol=1e-5), "mismatch vs reference"

    print("KERNEL_OK")
</pallas_src>

<mosaic_0001>
module attributes {stable_mosaic.version = 11 : i64} {
  func.func @_wnprelu_kernel(%arg0: i32, %arg1: i32, %arg2: memref<8x256xf32, #tpu.memory_space<vmem>>, %arg3: memref<8x5xf32, #tpu.memory_space<vmem>>, %arg4: memref<8x256xf32, #tpu.memory_space<vmem>>) attributes {dimension_semantics = [#tpu.dimension_semantics<parallel>, #tpu.dimension_semantics<parallel>], iteration_bounds = array<i64: 1, 1>, scalar_prefetch = 0 : i64, scratch_operands = 0 : i64, tpu.core_type = #tpu.core_type<tc>, window_params = [{transform_indices = @transform_0, window_bounds = array<i64: 8, 256>}, {transform_indices = @transform_1, window_bounds = array<i64: 8, 5>}, {transform_indices = @transform_2, window_bounds = array<i64: 8, 256>}]} {
    %c0 = arith.constant 0 : index
    %c0_0 = arith.constant 0 : index
    %0 = vector.load %arg2[%c0, %c0_0] : memref<8x256xf32, #tpu.memory_space<vmem>>, vector<8x256xf32>
    %c0_1 = arith.constant 0 : index
    %c0_2 = arith.constant 0 : index
    %1 = vector.load %arg3[%c0_1, %c0_2] : memref<8x5xf32, #tpu.memory_space<vmem>>, vector<8x1xf32>
    %c0_3 = arith.constant 0 : index
    %c1 = arith.constant 1 : index
    %2 = vector.load %arg3[%c0_3, %c1] : memref<8x5xf32, #tpu.memory_space<vmem>>, vector<8x1xf32>
    %3 = vector.broadcast %2 : vector<8x1xf32> to vector<8x256xf32>
    %4 = arith.mulf %3, %0 : vector<8x256xf32>
    %c0_4 = arith.constant 0 : index
    %c2 = arith.constant 2 : index
    %5 = vector.load %arg3[%c0_4, %c2] : memref<8x5xf32, #tpu.memory_space<vmem>>, vector<8x1xf32>
    %6 = vector.broadcast %5 : vector<8x1xf32> to vector<8x256xf32>
    %7 = arith.addf %4, %6 : vector<8x256xf32>
    %c0_5 = arith.constant 0 : index
    %c3 = arith.constant 3 : index
    %8 = vector.load %arg3[%c0_5, %c3] : memref<8x5xf32, #tpu.memory_space<vmem>>, vector<8x1xf32>
    %9 = vector.broadcast %8 : vector<8x1xf32> to vector<8x256xf32>
    %10 = arith.mulf %9, %0 : vector<8x256xf32>
    %c0_6 = arith.constant 0 : index
    %c4 = arith.constant 4 : index
    %11 = vector.load %arg3[%c0_6, %c4] : memref<8x5xf32, #tpu.memory_space<vmem>>, vector<8x1xf32>
    %12 = vector.broadcast %11 : vector<8x1xf32> to vector<8x256xf32>
    %13 = arith.addf %10, %12 : vector<8x256xf32>
    %14 = vector.broadcast %1 : vector<8x1xf32> to vector<8x256xf32>
    %15 = arith.cmpf oge, %0, %14 : vector<8x256xf32>
    %16 = arith.select %15, %7, %13 : vector<8x256xi1>, vector<8x256xf32>
    %c0_7 = arith.constant 0 : index
    %c0_8 = arith.constant 0 : index
    %17 = vector.load %arg4[%c0_7, %c0_8] : memref<8x256xf32, #tpu.memory_space<vmem>>, vector<8x256xf32>
    tpu.vector_store %arg4[%c0_7, %c0_8], %16 {strides = array<i32>} : memref<8x256xf32, #tpu.memory_space<vmem>>, vector<8x256xf32>,
    return
  }
  func.func @transform_0(%arg0: i32, %arg1: i32) -> (i32, i32) {
    %c0_i32 = arith.constant 0 : i32
    return %arg0, %arg1 : i32, i32
  }
  func.func @transform_1(%arg0: i32, %arg1: i32) -> (i32, i32) {
    %c0_i32 = arith.constant 0 : i32
    %c0_i32_0 = arith.constant 0 : i32
    return %arg0, %c0_i32 : i32, i32
  }
  func.func @transform_2(%arg0: i32, %arg1: i32) -> (i32, i32) {
    %c0_i32 = arith.constant 0 : i32
    return %arg0, %arg1 : i32, i32
  }
}

</mosaic_0001>

<llo_original>
// kernel: tpu_custom_call.1
$region0: #{tpu_custom_call.1}
  #allocation0 [shape = 'u32[]', space=smem, size = 0x4, offset = 0x4, fixed_abs, tag = 'smem constant byte address 0x4 - core index']
  #allocation1 [shape = 'u32[144,128]{1,0:T(1,128)}', space=vmem, size = 0x12000, scoped, tag = 'internal scratch']
  %s0 = inlined_call_operand.hbm [shape: f32[8,256], index: 0, kind: input, shape index: {}]
  %s1 = inlined_call_operand.hbm [shape: f32[8,5], index: 1, kind: input, shape index: {}]
  %s2 = inlined_call_operand.hbm [shape: f32[8,256], index: 2, kind: output, shape index: {}]
  %s3 = sld [smem:[#allocation0]]
  $region26: #{tpu_custom_call.1} parent=0
    _
  %s5 = ssub.s32 1, %s3
  %s6 = scalar_select 0, %s5, %s3
  $region1: #{tpu_custom_call.1} parent=0
    #allocation2 [shape = 'u8[8192]{0}', space=vmem, size = 0x2000, scoped, tag = 'input window, operand 0, single buffered']
    #allocation3 [shape = 's32[1]{0}', space=sflag, size = 0x4, scoped, tag = 'scoped memory for tpu_custom_call.1']
    #allocation4 [shape = 's32[1]{0}', space=sflag, size = 0x4, scoped, tag = 'scoped memory for tpu_custom_call.1']
    #allocation5 [shape = 'u8[4096]{0}', space=vmem, size = 0x1000, scoped, tag = 'input window, operand 1, single buffered']
    #allocation6 [shape = 's32[1]{0}', space=sflag, size = 0x4, scoped, tag = 'scoped memory for tpu_custom_call.1']
    #allocation7 [shape = 'u8[8192]{0}', space=vmem, size = 0x2000, scoped, tag = 'output window, operand 0, single buffered']
    %7 = vsyncpa [#allocation3], 0
    %8 = vsyncpa [#allocation6], 0
    %9 = vsyncpa [#allocation4], 0
    // Predicated region
    $region2: #{tpu_custom_call.1} parent=1 // pred_check
      _
    $region3: #{tpu_custom_call.1} parent=1 // pred_check_branch
      %11 = sbr.rel (0) target = $region5
    $region4: #{tpu_custom_call.1} parent=1 // pred_region
      %s13 = ssub.s32 256, 256
      %14 = vsyncadd [#allocation3], %s13
      %s16 = sshll.u32 [#allocation2], 4
      %s17 = int_to_ptr.vmem [resolvable:$true] %s16
      %19 = dma.hbm_to_vmem [thread:$0]  %s0, 256, %s17, [#allocation3]
    $region5: #{tpu_custom_call.1} parent=1 // pred_fallthru
      _
    // Predicated region
    $region6: #{tpu_custom_call.1} parent=1 // pred_check
      _
    $region7: #{tpu_custom_call.1} parent=1 // pred_check_branch
      %21 = sbr.rel (0) target = $region9
    $region8: #{tpu_custom_call.1} parent=1 // pred_region
      %s23 = ssub.s32 128, 128
      %24 = vsyncadd [#allocation6], %s23
      %s26 = sshll.u32 [#allocation5], 4
      %s27 = int_to_ptr.vmem [resolvable:$true] %s26
      %29 = dma.hbm_to_vmem [thread:$0]  %s1, 128, %s27, [#allocation6]
    $region9: #{tpu_custom_call.1} parent=1 // pred_fallthru
      _
    // Predicated region
    $region10: #{tpu_custom_call.1} parent=1 // pred_check
      _
    $region11: #{tpu_custom_call.1} parent=1 // pred_check_branch
      %31 = sbr.rel (0) target = $region13
    $region12: #{tpu_custom_call.1} parent=1 // pred_region
      %32 = dma.done [#allocation3], 256
    $region13: #{tpu_custom_call.1} parent=1 // pred_fallthru
      _
    // Predicated region
    $region14: #{tpu_custom_call.1} parent=1 // pred_check
      _
    $region15: #{tpu_custom_call.1} parent=1 // pred_check_branch
      %34 = sbr.rel (0) target = $region17
    $region16: #{tpu_custom_call.1} parent=1 // pred_region
      %35 = dma.done [#allocation6], 128
    $region17: #{tpu_custom_call.1} parent=1 // pred_fallthru
      _
    %v36 = vld [vmem:[#allocation2] sm:$0xff]
    %v37 = vld [vmem:[#allocation2 + $0x8] sm:$0xff]
    %v38 = vld [vmem:[#allocation5] sm:$0xff]
    %40 = vset.pattern.permute.xlu0 1
    %41 = vperm.xlu0 %40, %v38
    %v42 = vpop.permute.xlu0 %41
    %v44 = vmul.f32 %v42, %v36
    %v45 = vmul.f32 %v42, %v37
    %46 = vset.pattern.permute.xlu0 2
    %47 = vperm.xlu0 %46, %v38
    %v48 = vpop.permute.xlu0 %47
    %v50 = vadd.f32 %v44, %v48
    %v51 = vadd.f32 %v45, %v48
    %52 = vset.pattern.permute.xlu0 3
    %53 = vperm.xlu0 %52, %v38
    %v54 = vpop.permute.xlu0 %53
    %v56 = vmul.f32 %v54, %v36
    %v57 = vmul.f32 %v54, %v37
    %58 = vset.pattern.permute.xlu0 4
    %59 = vperm.xlu0 %58, %v38
    %v60 = vpop.permute.xlu0 %59
    %v62 = vadd.f32 %v56, %v60
    %v63 = vadd.f32 %v57, %v60
    %64 = vset.pattern.permute.xlu0 0
    %65 = vperm.xlu0 %64, %v38
    %v66 = vpop.permute.xlu0 %65
    %vm68 = vcmp.ge.f32.partialorder %v36, %v66
    %vm69 = vcmp.ge.f32.partialorder %v37, %v66
    %v70 = vsel %vm68, %v50, %v62
    %v71 = vsel %vm69, %v51, %v63
    %72 = vst [vmem:[#allocation7] sm:$0xff] %v70
    %73 = vst [vmem:[#allocation7 + $0x8] sm:$0xff] %v71
    // Predicated region
    $region18: #{tpu_custom_call.1} parent=1 // pred_check
      _
    $region19: #{tpu_custom_call.1} parent=1 // pred_check_branch
      %75 = sbr.rel (0) target = $region21
    $region20: #{tpu_custom_call.1} parent=1 // pred_region
      %s77 = ssub.s32 256, 256
      %78 = vsyncadd [#allocation4], %s77
      %s80 = sshll.u32 [#allocation7], 4
      %s81 = int_to_ptr.vmem [resolvable:$true] %s80
      %83 = dma.vmem_to_hbm [thread:$0]  %s81, 256, %s2, [#allocation4]
    $region21: #{tpu_custom_call.1} parent=1 // pred_fallthru
      _
    // Predicated region
    $region22: #{tpu_custom_call.1} parent=1 // pred_check
      _
    $region23: #{tpu_custom_call.1} parent=1 // pred_check_branch
      %85 = sbr.rel (0) target = $region25
    $region24: #{tpu_custom_call.1} parent=1 // pred_region
      %86 = dma.done [#allocation4], 256
    $region25: #{tpu_custom_call.1} parent=1 // pred_fallthru
      _
    %87 = vsyncpa [#allocation3], 1
    %88 = vsyncpa [#allocation6], 1
    %89 = vsyncpa [#allocation4], 1

</llo_original>
